<compile_context>
chip_gen: v7x
topology: tpu7x:2x2x1
jax: 0.10.0
libtpu: 0.0.40
codegen_flags: <defaults>
</compile_context>

<pallas_src>
import functools

import jax
import jax.numpy as jnp
import numpy as np
from jax.experimental import pallas as pl
from jax.experimental.pallas import tpu as pltpu


def _round_up(x, m):
    return (x + m - 1) // m * m


# ----------------------------------------------------------------------------
# Fused Pallas kernel
# ----------------------------------------------------------------------------
def _fused_mlp_base_kernel(x_ref, w1_ref, w2_ref, aux_ref, hb_ref,
                           actor_ref, heads_ref, *, hidden_size, est_value):
    """critic+actor(+beta) 2-layer tanh MLPs fused into lane-dense matmuls.

    x_ref    : [TILE_N, num_inputs]           (compute dtype, f32 or bf16)
    w1_ref   : [num_inputs, K*H]              concat(critic|actor|beta) layer1
    w2_ref   : [K*H, K*H]                     block-diagonal layer2
    aux_ref  : [4, K*H] f32                   rows: b1, b2, head_w(value), head_w(beta)
    hb_ref   : [1, 2*H] f32                   lanes [:H]=critic_linear_b, [H:]=beta_linear_b
    actor_ref: [TILE_N, H]                    hidden_actor
    heads_ref: [TILE_N, 2*H]                  value bcast | beta (or value) bcast
    """
    H = hidden_size
    x = x_ref[...]
    aux = aux_ref[...]
    b1 = aux[0:1, :]
    b2 = aux[1:2, :]
    hw_value = aux[2:3, :]
    hw_beta = aux[3:4, :]

    # Layer 1: one lane-dense matmul for all sub-networks (f32 accumulation).
    h1 = jnp.tanh(jnp.dot(x, w1_ref[...],
                          preferred_element_type=jnp.float32) + b1)
    # Layer 2: one block-diagonal matmul.
    h1 = h1.astype(w2_ref.dtype)
    h2 = jnp.tanh(jnp.dot(h1, w2_ref[...],
                          preferred_element_type=jnp.float32) + b2)

    # hidden_actor is the middle (or upper) H-wide block of h2.
    actor_ref[...] = h2[:, H:2 * H].astype(actor_ref.dtype)

    # Heads: VPU multiply + XLU lane-sum instead of (H,1) matmuls.
    # hw_value is zero outside the critic block, hw_beta zero outside beta.
    value_nb = jnp.sum(h2 * hw_value, axis=-1, keepdims=True)       # [TILE_N,1]
    if est_value:
        beta_nb = jnp.sum(h2 * hw_beta, axis=-1, keepdims=True)     # [TILE_N,1]
    else:
        beta_nb = value_nb                                          # unused lanes

    tn = x.shape[0]
    heads = jnp.concatenate([jnp.broadcast_to(value_nb, (tn, H)),
                             jnp.broadcast_to(beta_nb, (tn, H))], axis=-1)
    heads = heads + hb_ref[...]                                     # add head biases
    if est_value:
        lane = jax.lax.broadcasted_iota(jnp.int32, heads.shape, 1)
        heads = jnp.where(lane < H, heads, jax.nn.sigmoid(heads))   # sigmoid on beta half
    heads_ref[...] = heads.astype(heads_ref.dtype)


# ----------------------------------------------------------------------------
# Parameter init (mirrors the torch module) and host-side packing
# ----------------------------------------------------------------------------
def _orthogonal(key, in_dim, out_dim, gain):
    # torch weight is [out, in] orthogonal; store its transpose [in, out].
    w = jax.nn.initializers.orthogonal(scale=gain)(key, (out_dim, in_dim),
                                                   jnp.float32)
    return jnp.transpose(w)


def init_mlp_base_params(key, num_inputs, hidden_size=64, init_beta=0.0):
    ks = jax.random.split(key, 8)
    g = jnp.sqrt(2.0)  # np.sqrt(2) gain for actor/critic/critic_linear
    return {
        # critic
        "critic_w1": _orthogonal(ks[0], num_inputs, hidden_size, g),
        "critic_b1": jnp.zeros((1, hidden_size), jnp.float32),
        "critic_w2": _orthogonal(ks[1], hidden_size, hidden_size, g),
        "critic_b2": jnp.zeros((1, hidden_size), jnp.float32),
        # actor
        "actor_w1": _orthogonal(ks[2], num_inputs, hidden_size, g),
        "actor_b1": jnp.zeros((1, hidden_size), jnp.float32),
        "actor_w2": _orthogonal(ks[3], hidden_size, hidden_size, g),
        "actor_b2": jnp.zeros((1, hidden_size), jnp.float32),
        # critic_linear
        "critic_linear_w": _orthogonal(ks[4], hidden_size, 1, g),
        "critic_linear_b": jnp.zeros((1, 1), jnp.float32),
        # beta_net_value (default gain=1, bias = init_beta)
        "beta_w1": _orthogonal(ks[5], num_inputs, hidden_size, 1.0),
        "beta_b1": jnp.full((1, hidden_size), init_beta, jnp.float32),
        "beta_w2": _orthogonal(ks[6], hidden_size, hidden_size, 1.0),
        "beta_b2": jnp.full((1, hidden_size), init_beta, jnp.float32),
        # beta_net_value_linear (+ sigmoid)
        "beta_linear_w": _orthogonal(ks[7], hidden_size, 1, 1.0),
        "beta_linear_b": jnp.full((1, 1), init_beta, jnp.float32),
    }


def pack_mlp_base_params(params, hidden_size, est_value=False,
                         compute_dtype=jnp.float32):
    """Pack the 11/17 small tensors into 4 lane-dense arrays (done once, host side)."""
    H = hidden_size
    w1_cols = [params["critic_w1"], params["actor_w1"]]
    b1_cols = [params["critic_b1"], params["actor_b1"]]
    w2_blks = [params["critic_w2"], params["actor_w2"]]
    b2_cols = [params["critic_b2"], params["actor_b2"]]
    if est_value:
        w1_cols.append(params["beta_w1"])
        b1_cols.append(params["beta_b1"])
        w2_blks.append(params["beta_w2"])
        b2_cols.append(params["beta_b2"])
    k = len(w2_blks)
    kh = k * H

    w1 = jnp.concatenate(w1_cols, axis=1).astype(compute_dtype)       # [in, k*H]
    b1 = jnp.concatenate(b1_cols, axis=1).astype(jnp.float32)         # [1, k*H]
    w2 = jnp.zeros((kh, kh), jnp.float32)
    for j, blk in enumerate(w2_blks):                                  # block-diagonal
        w2 = w2.at[j * H:(j + 1) * H, j * H:(j + 1) * H].set(blk)
    w2 = w2.astype(compute_dtype)
    b2 = jnp.concatenate(b2_cols, axis=1).astype(jnp.float32)

    hw_value = jnp.zeros((1, kh), jnp.float32)
    hw_value = hw_value.at[0, :H].set(params["critic_linear_w"][:, 0])
    hw_beta = jnp.zeros((1, kh), jnp.float32)
    if est_value:
        hw_beta = hw_beta.at[0, 2 * H:3 * H].set(params["beta_linear_w"][:, 0])

    aux = jnp.concatenate([b1, b2, hw_value, hw_beta], axis=0)         # [4, k*H]
    head_b = jnp.concatenate(
        [jnp.full((1, H), params["critic_linear_b"][0, 0], jnp.float32),
         jnp.full((1, H), params["beta_linear_b"][0, 0], jnp.float32)],
        axis=1)                                                        # [1, 2*H]
    return {"w1": w1, "w2": w2, "aux": aux, "head_b": head_b}


# ----------------------------------------------------------------------------
# Forward (matches MLPBase.forward for recurrent=False)
# ----------------------------------------------------------------------------
@functools.partial(jax.jit, static_argnames=("est_value", "fixed_beta", "tile_n"))
def mlp_base_forward(inputs, rnn_hxs, masks, packed_params,
                     est_value=False, fixed_beta=1.0, tile_n=1024):
    # TODO(synk): recurrent GRU path not implemented (module default recurrent=False).
    k = 3 if est_value else 2
    kh = packed_params["w1"].shape[1]
    H = kh // k
    n, d_in = inputs.shape

    x = inputs.astype(packed_params["w1"].dtype)
    # Batch tile: multiple of 16 (covers bf16 sublane packing), capped by tile_n.
    tn = min(tile_n, _round_up(n, 16))
    n_pad = _round_up(n, tn)
    if n_pad != n:
        x = jnp.pad(x, ((0, n_pad - n), (0, 0)))
    grid = (n_pad // tn,)

    kernel = functools.partial(_fused_mlp_base_kernel,
                               hidden_size=H, est_value=est_value)
    actor, heads = pl.pallas_call(
        kernel,
        out_shape=(jax.ShapeDtypeStruct((n_pad, H), jnp.float32),
                   jax.ShapeDtypeStruct((n_pad, 2 * H), jnp.float32)),
        grid=grid,
        in_specs=[
            pl.BlockSpec((tn, d_in), lambda i: (i, 0)),     # x tile
            pl.BlockSpec((d_in, kh), lambda i: (0, 0)),     # w1 (VMEM-resident)
            pl.BlockSpec((kh, kh), lambda i: (0, 0)),       # w2 (VMEM-resident)
            pl.BlockSpec((4, kh), lambda i: (0, 0)),        # aux rows
            pl.BlockSpec((1, 2 * H), lambda i: (0, 0)),     # head biases
        ],
        out_specs=(pl.BlockSpec((tn, H), lambda i: (i, 0)),
                   pl.BlockSpec((tn, 2 * H), lambda i: (i, 0))),
        compiler_params=pltpu.CompilerParams(
            dimension_semantics=("parallel",),              # shard tiles on v7x's 2 TCs
            vmem_limit_bytes=32 * 1024 * 1024),             # safe on v7x's 64 MiB VMEM
    )(x, packed_params["w1"], packed_params["w2"],
      packed_params["aux"], packed_params["head_b"])

    value = heads[:n, 0:1]
    hidden_actor = actor[:n]
    if est_value:
        beta_value = heads[:n, H:H + 1]
    else:
        beta_value = jnp.ones_like(masks) * fixed_beta
    return value, hidden_actor, rnn_hxs, beta_value


# ----------------------------------------------------------------------------
# Pure-JAX reference (unpacked params) for correctness checking
# ----------------------------------------------------------------------------
def mlp_base_reference(inputs, rnn_hxs, masks, params, est_value=False,
                       fixed_beta=1.0):
    x = inputs.astype(jnp.float32)
    hc = jnp.tanh(x @ params["critic_w1"] + params["critic_b1"])
    hc = jnp.tanh(hc @ params["critic_w2"] + params["critic_b2"])
    value = hc @ params["critic_linear_w"] + params["critic_linear_b"]
    ha = jnp.tanh(x @ params["actor_w1"] + params["actor_b1"])
    ha = jnp.tanh(ha @ params["actor_w2"] + params["actor_b2"])
    if est_value:
        hb = jnp.tanh(x @ params["beta_w1"] + params["beta_b1"])
        hb = jnp.tanh(hb @ params["beta_w2"] + params["beta_b2"])
        beta = jax.nn.sigmoid(hb @ params["beta_linear_w"]
                              + params["beta_linear_b"])
    else:
        beta = jnp.ones_like(masks) * fixed_beta
    return value, ha, rnn_hxs, beta


# ----------------------------------------------------------------------------
# Demo
# ----------------------------------------------------------------------------
if __name__ == "__main__":
    key = jax.random.PRNGKey(0)
    k_param, k_x = jax.random.split(key)

    num_inputs = 32
    hidden_size = 64
    batch = 8

    params = init_mlp_base_params(k_param, num_inputs, hidden_size)
    x = jax.random.normal(k_x, (batch, num_inputs), jnp.float32)
    rnn_hxs = jnp.zeros((batch, 1), jnp.float32)   # recurrent_hidden_state_size=1
    masks = jnp.ones((batch, 1), jnp.float32)

    # Host-side packed params (f32 exact path + bf16 fast path).
    packed_f32 = pack_mlp_base_params(params, hidden_size, est_value=False,
                                      compute_dtype=jnp.float32)
    packed_f32_beta = pack_mlp_base_params(params, hidden_size, est_value=True,
                                           compute_dtype=jnp.float32)
    packed_bf16_beta = pack_mlp_base_params(params, hidden_size, est_value=True,
                                            compute_dtype=jnp.bfloat16)

    # Default config: est_value=False, fixed_beta=1.
    out = mlp_base_forward(x, rnn_hxs, masks, packed_f32,
                           est_value=False, fixed_beta=1.0)
    jax.block_until_ready(out)
    ref = mlp_base_reference(x, rnn_hxs, masks, params,
                             est_value=False, fixed_beta=1.0)
    for o, r in zip(out, ref):
        np.testing.assert_allclose(np.asarray(o), np.asarray(r),
                                   rtol=5e-2, atol=5e-2)

    # est_value=True path (beta network fused into the same kernel).
    out_b = mlp_base_forward(x, rnn_hxs, masks, packed_f32_beta,
                             est_value=True, fixed_beta=1.0)
    jax.block_until_ready(out_b)
    ref_b = mlp_base_reference(x, rnn_hxs, masks, params,
                               est_value=True, fixed_beta=1.0)
    for o, r in zip(out_b, ref_b):
        np.testing.assert_allclose(np.asarray(o), np.asarray(r),
                                   rtol=5e-2, atol=5e-2)

    # bf16 matmul-input path (HBM/MXU optimization); loose tolerance.
    out_bf = mlp_base_forward(x, rnn_hxs, masks, packed_bf16_beta,
                              est_value=True, fixed_beta=1.0)
    jax.block_until_ready(out_bf)
    for o, r in zip(out_bf, ref_b):
        np.testing.assert_allclose(np.asarray(o), np.asarray(r),
                                   rtol=1.5e-1, atol=1.5e-1)

    value, hidden_actor, rnn_hxs_out, beta_value = out
    assert value.shape == (batch, 1)
    assert hidden_actor.shape == (batch, hidden_size)
    assert rnn_hxs_out.shape == rnn_hxs.shape
    assert beta_value.shape == masks.shape
    assert out_b[3].shape == (batch, 1)

    print("KERNEL_OK")
</pallas_src>

<mosaic_0001>
module attributes {stable_mosaic.version = 11 : i64} {
  func.func @_fused_mlp_base_kernel(%arg0: i32, %arg1: memref<16x32xf32, #tpu.memory_space<vmem>>, %arg2: memref<32x128xf32, #tpu.memory_space<vmem>>, %arg3: memref<128x128xf32, #tpu.memory_space<vmem>>, %arg4: memref<4x128xf32, #tpu.memory_space<vmem>>, %arg5: memref<1x128xf32, #tpu.memory_space<vmem>>, %arg6: memref<16x64xf32, #tpu.memory_space<vmem>>, %arg7: memref<16x128xf32, #tpu.memory_space<vmem>>) attributes {dimension_semantics = [#tpu.dimension_semantics<parallel>], iteration_bounds = array<i64: 1>, scalar_prefetch = 0 : i64, scratch_operands = 0 : i64, tpu.core_type = #tpu.core_type<tc>, window_params = [{transform_indices = @transform_0, window_bounds = array<i64: 16, 32>}, {pipeline_mode = #tpu.pipeline_mode<synchronous>, transform_indices = @transform_1, window_bounds = array<i64: 32, 128>}, {pipeline_mode = #tpu.pipeline_mode<synchronous>, transform_indices = @transform_2, window_bounds = array<i64: 128, 128>}, {pipeline_mode = #tpu.pipeline_mode<synchronous>, transform_indices = @transform_3, window_bounds = array<i64: 4, 128>}, {pipeline_mode = #tpu.pipeline_mode<synchronous>, transform_indices = @transform_4, window_bounds = array<i64: 1, 128>}, {transform_indices = @transform_5, window_bounds = array<i64: 16, 64>}, {transform_indices = @transform_6, window_bounds = array<i64: 16, 128>}]} {
    %c0 = arith.constant 0 : index
    %c0_0 = arith.constant 0 : index
    %0 = vector.load %arg1[%c0, %c0_0] : memref<16x32xf32, #tpu.memory_space<vmem>>, vector<16x32xf32>
    %c0_1 = arith.constant 0 : index
    %c0_2 = arith.constant 0 : index
    %1 = vector.load %arg4[%c0_1, %c0_2] : memref<4x128xf32, #tpu.memory_space<vmem>>, vector<4x128xf32>
    %2 = vector.extract_strided_slice %1 {offsets = [0, 0], sizes = [1, 128], strides = [1, 1]} : vector<4x128xf32> to vector<1x128xf32>
    %3 = vector.extract_strided_slice %1 {offsets = [1, 0], sizes = [1, 128], strides = [1, 1]} : vector<4x128xf32> to vector<1x128xf32>
    %4 = vector.extract_strided_slice %1 {offsets = [2, 0], sizes = [1, 128], strides = [1, 1]} : vector<4x128xf32> to vector<1x128xf32>
    %c0_3 = arith.constant 0 : index
    %c0_4 = arith.constant 0 : index
    %5 = vector.load %arg2[%c0_3, %c0_4] : memref<32x128xf32, #tpu.memory_space<vmem>>, vector<32x128xf32>
    %cst = arith.constant dense<0.000000e+00> : vector<16x128xf32>
    %6 = tpu.matmul %0, %5, %cst {dimension_numbers = #tpu.dot_dimension_numbers<[1], [0], [0], [1], [0, 0, 1, 1], [], []>} : vector<16x32xf32>, vector<32x128xf32>, vector<16x128xf32> -> vector<16x128xf32>
    %7 = vector.broadcast %2 : vector<1x128xf32> to vector<16x128xf32>
    %8 = arith.addf %6, %7 : vector<16x128xf32>
    %9 = math.tanh %8 : vector<16x128xf32>
    %c0_5 = arith.constant 0 : index
    %c0_6 = arith.constant 0 : index
    %10 = vector.load %arg3[%c0_5, %c0_6] : memref<128x128xf32, #tpu.memory_space<vmem>>, vector<128x128xf32>
    %cst_7 = arith.constant dense<0.000000e+00> : vector<16x128xf32>
    %11 = tpu.matmul %9, %10, %cst_7 {dimension_numbers = #tpu.dot_dimension_numbers<[1], [0], [0], [1], [0, 0, 1, 1], [], []>} : vector<16x128xf32>, vector<128x128xf32>, vector<16x128xf32> -> vector<16x128xf32>
    %12 = vector.broadcast %3 : vector<1x128xf32> to vector<16x128xf32>
    %13 = arith.addf %11, %12 : vector<16x128xf32>
    %14 = math.tanh %13 : vector<16x128xf32>
    %15 = vector.extract_strided_slice %14 {offsets = [0, 64], sizes = [16, 64], strides = [1, 1]} : vector<16x128xf32> to vector<16x64xf32>
    %c0_8 = arith.constant 0 : index
    %c0_9 = arith.constant 0 : index
    %16 = vector.load %arg6[%c0_8, %c0_9] : memref<16x64xf32, #tpu.memory_space<vmem>>, vector<16x64xf32>
    tpu.vector_store %arg6[%c0_8, %c0_9], %15 {strides = array<i32>} : memref<16x64xf32, #tpu.memory_space<vmem>>, vector<16x64xf32>,
    %17 = vector.broadcast %4 : vector<1x128xf32> to vector<16x128xf32>
    %18 = arith.mulf %14, %17 : vector<16x128xf32>
    %cst_10 = arith.constant dense<0.000000e+00> : vector<16xf32>
    %19 = vector.multi_reduction <add>, %18, %cst_10 [1] : vector<16x128xf32> to vector<16xf32>
    %20 = vector.shape_cast %19 : vector<16xf32> to vector<16x1xf32>
    %21 = vector.shape_cast %20 : vector<16x1xf32> to vector<16x1xf32>
    %22 = vector.broadcast %21 : vector<16x1xf32> to vector<16x64xf32>
    %23 = vector.shape_cast %20 : vector<16x1xf32> to vector<16x1xf32>
    %24 = vector.broadcast %23 : vector<16x1xf32> to vector<16x64xf32>
    %25 = tpu.concatenate %22, %24 in 1 : vector<16x64xf32>, vector<16x64xf32> -> vector<16x128xf32>
    %c0_11 = arith.constant 0 : index
    %c0_12 = arith.constant 0 : index
    %26 = vector.load %arg5[%c0_11, %c0_12] : memref<1x128xf32, #tpu.memory_space<vmem>>, vector<1x128xf32>
    %27 = vector.broadcast %26 : vector<1x128xf32> to vector<16x128xf32>
    %28 = arith.addf %25, %27 : vector<16x128xf32>
    %c0_13 = arith.constant 0 : index
    %c0_14 = arith.constant 0 : index
    %29 = vector.load %arg7[%c0_13, %c0_14] : memref<16x128xf32, #tpu.memory_space<vmem>>, vector<16x128xf32>
    tpu.vector_store %arg7[%c0_13, %c0_14], %28 {strides = array<i32>} : memref<16x128xf32, #tpu.memory_space<vmem>>, vector<16x128xf32>,
    return
  }
  func.func @transform_0(%arg0: i32) -> (i32, i32) {
    %c0_i32 = arith.constant 0 : i32
    %c0_i32_0 = arith.constant 0 : i32
    return %arg0, %c0_i32 : i32, i32
  }
  func.func @transform_1(%arg0: i32) -> (i32, i32) {
    %c0_i32 = arith.constant 0 : i32
    %c0_i32_0 = arith.constant 0 : i32
    %c0_i32_1 = arith.constant 0 : i32
    return %c0_i32, %c0_i32_0 : i32, i32
  }
  func.func @transform_2(%arg0: i32) -> (i32, i32) {
    %c0_i32 = arith.constant 0 : i32
    %c0_i32_0 = arith.constant 0 : i32
    %c0_i32_1 = arith.constant 0 : i32
    return %c0_i32, %c0_i32_0 : i32, i32
  }
  func.func @transform_3(%arg0: i32) -> (i32, i32) {
    %c0_i32 = arith.constant 0 : i32
    %c0_i32_0 = arith.constant 0 : i32
    %c0_i32_1 = arith.constant 0 : i32
    return %c0_i32, %c0_i32_0 : i32, i32
  }
  func.func @transform_4(%arg0: i32) -> (i32, i32) {
    %c0_i32 = arith.constant 0 : i32
    %c0_i32_0 = arith.constant 0 : i32
    %c0_i32_1 = arith.constant 0 : i32
    return %c0_i32, %c0_i32_0 : i32, i32
  }
  func.func @transform_5(%arg0: i32) -> (i32, i32) {
    %c0_i32 = arith.constant 0 : i32
    %c0_i32_0 = arith.constant 0 : i32
    return %arg0, %c0_i32 : i32, i32
  }
  func.func @transform_6(%arg0: i32) -> (i32, i32) {
    %c0_i32 = arith.constant 0 : i32
    %c0_i32_0 = arith.constant 0 : i32
    return %arg0, %c0_i32 : i32, i32
  }
}

</mosaic_0001>

<llo_original>
// kernel: mlp_base_forward.1
$region0: #{mlp_base_forward.1}
  #allocation0 [shape = 'u32[]', space=smem, size = 0x4, offset = 0x4, fixed_abs, tag = 'smem constant byte address 0x4 - core index']
  #allocation1 [shape = 'u32[144,128]{1,0:T(1,128)}', space=vmem, size = 0x12000, scoped, tag = 'internal scratch']
  %s0 = inlined_call_operand.vmem [shape: f32[16,32], index: 0, kind: input, shape index: {}]
  %s1 = inlined_call_operand.vmem [shape: f32[32,128], index: 1, kind: input, shape index: {}]
  %s2 = inlined_call_operand.hbm [shape: f32[128,128], index: 2, kind: input, shape index: {}]
  %s3 = inlined_call_operand.hbm [shape: f32[4,128], index: 3, kind: input, shape index: {}]
  %s4 = inlined_call_operand.hbm [shape: f32[1,128], index: 4, kind: input, shape index: {}]
  %s5 = inlined_call_operand.vmem [shape: f32[16,64], index: 5, kind: output, shape index: {0}]
  %s6 = inlined_call_operand.vmem [shape: f32[16,128], index: 6, kind: output, shape index: {1}]
  %7 = xla_tuple %s5, %s6
  %s8 = sld [smem:[#allocation0]]
  $region50: #{mlp_base_forward.1} parent=0
    _
  %s10 = ssub.s32 1, %s8
  %s11 = scalar_select 0, %s10, %s8
  $region1: #{mlp_base_forward.1} parent=0
    #allocation2 [shape = 'u8[65536]{0}', space=vmem, size = 0x10000, scoped, tag = 'input window, operand 2, single buffered']
    #allocation3 [shape = 's32[1]{0}', space=sflag, size = 0x4, scoped, tag = 'scoped memory for mlp_base_forward.1']
    #allocation4 [shape = 'u8[2048]{0}', space=vmem, size = 0x800, scoped, tag = 'input window, operand 3, single buffered']
    #allocation5 [shape = 's32[1]{0}', space=sflag, size = 0x4, scoped, tag = 'scoped memory for mlp_base_forward.1']
    #allocation6 [shape = 'u8[512]{0}', space=vmem, size = 0x400, scoped, tag = 'input window, operand 4, single buffered']
    %12 = vsyncpa [#allocation3], 0
    %13 = vsyncpa [#allocation5], 0
    // Predicated region
    $region2: #{mlp_base_forward.1} parent=1 // pred_check
      _
    $region3: #{mlp_base_forward.1} parent=1 // pred_check_branch
      %15 = sbr.rel (0) target = $region5
    $region4: #{mlp_base_forward.1} parent=1 // pred_region
      _
    $region5: #{mlp_base_forward.1} parent=1 // pred_fallthru
      _
    // Predicated region
    $region6: #{mlp_base_forward.1} parent=1 // pred_check
      _
    $region7: #{mlp_base_forward.1} parent=1 // pred_check_branch
      %17 = sbr.rel (0) target = $region9
    $region8: #{mlp_base_forward.1} parent=1 // pred_region
      _
    $region9: #{mlp_base_forward.1} parent=1 // pred_fallthru
      _
    // Predicated region
    $region10: #{mlp_base_forward.1} parent=1 // pred_check
      _
    $region11: #{mlp_base_forward.1} parent=1 // pred_check_branch
      %19 = sbr.rel (0) target = $region13
    $region12: #{mlp_base_forward.1} parent=1 // pred_region
      %s21 = ssub.s32 2048, 2048
      %22 = vsyncadd [#allocation3], %s21
      %s23 = sshll.u32 [#allocation2], 4
      %s24 = int_to_ptr.vmem [resolvable:$true] %s23
      %29 = dma.hbm_to_vmem [thread:$0]  %s2, 2048, %s24, [#allocation3], 128, 128, 8
    $region13: #{mlp_base_forward.1} parent=1 // pred_fallthru
      _
    // Predicated region
    $region14: #{mlp_base_forward.1} parent=1 // pred_check
      _
    $region15: #{mlp_base_forward.1} parent=1 // pred_check_branch
      %31 = sbr.rel (0) target = $region17
    $region16: #{mlp_base_forward.1} parent=1 // pred_region
      %s33 = ssub.s32 64, 64
      %34 = vsyncadd [#allocation5], %s33
      %s36 = sshll.u32 [#allocation4], 4
      %s37 = int_to_ptr.vmem [resolvable:$true] %s36
      %39 = dma.hbm_to_vmem [thread:$0]  %s3, 64, %s37, [#allocation5]
    $region17: #{mlp_base_forward.1} parent=1 // pred_fallthru
      _
    // Predicated region
    $region18: #{mlp_base_forward.1} parent=1 // pred_check
      _
    $region19: #{mlp_base_forward.1} parent=1 // pred_check_branch
      %41 = sbr.rel (0) target = $region21
    $region20: #{mlp_base_forward.1} parent=1 // pred_region
      %s43 = ssub.s32 16, 16
      %44 = vsyncadd [#allocation5], %s43
      %s46 = sshll.u32 [#allocation6], 4
      %s47 = int_to_ptr.vmem [resolvable:$true] %s46
      %49 = dma.hbm_to_vmem [thread:$0]  %s4, 16, %s47, [#allocation5]
    $region21: #{mlp_base_forward.1} parent=1 // pred_fallthru
      _
    // Predicated region
    $region22: #{mlp_base_forward.1} parent=1 // pred_check
      _
    $region23: #{mlp_base_forward.1} parent=1 // pred_check_branch
      %51 = sbr.rel (0) target = $region25
    $region24: #{mlp_base_forward.1} parent=1 // pred_region
      %52 = dma.done [#allocation3], 2048
    $region25: #{mlp_base_forward.1} parent=1 // pred_fallthru
      _
    // Predicated region
    $region26: #{mlp_base_forward.1} parent=1 // pred_check
      _
    $region27: #{mlp_base_forward.1} parent=1 // pred_check_branch
      %54 = sbr.rel (0) target = $region29
    $region28: #{mlp_base_forward.1} parent=1 // pred_region
      %55 = dma.done [#allocation5], 64
    $region29: #{mlp_base_forward.1} parent=1 // pred_fallthru
      _
    // Predicated region
    $region30: #{mlp_base_forward.1} parent=1 // pred_check
      _
    $region31: #{mlp_base_forward.1} parent=1 // pred_check_branch
      %57 = sbr.rel (0) target = $region33
    $region32: #{mlp_base_forward.1} parent=1 // pred_region
      %58 = dma.done [#allocation5], 16
    $region33: #{mlp_base_forward.1} parent=1 // pred_fallthru
      _
    %v59 = vld [vmem:[%s0] sm:$0xff]
    %v60 = vld [vmem:[%s0 + $0x8] sm:$0xff]
    %v61 = vld [vmem:[#allocation4] sm:$0xf]
    %v62 = vld [vmem:[%s1] sm:$0xff]
    %v63 = vld [vmem:[%s1 + $0x8] sm:$0xff]
    %v64 = vld [vmem:[%s1 + $0x10] sm:$0xff]
    %v65 = vld [vmem:[%s1 + $0x18] sm:$0xff]
    %v66 = vlaneseq
    %v67 = vshrl.u32 %v66, 7
    %v68 = vsub.s32 0, %v67
    %v69 = vrot.slane %v61, %v68
    %vm70 = vcmask 261120
    %v72 = vsel %vm70, %v59, 0
    %v75 = vsel %vm70, %v60, 0
    %77 = vmatprep.subr.mxu0 0.0
    %78 = vmatpush1.msra.mxu0 %v62
    %79 = vmatprep.subr.mxu0 0.0
    %80 = vmatpush1.msra.mxu0 %v63
    %81 = vmatprep.subr.mxu0 0.0
    %82 = vmatpush1.msra.mxu0 %v64
    %83 = vmatprep.subr.mxu0 0.0
    %84 = vmatpush1.msra.mxu0 %v65
    %85 = vmatprep.subr.mxu0 0.0
    %86 = vmatpush1.msra.mxu0 0.0
    %87 = vmatprep.subr.mxu0 0.0
    %88 = vmatpush1.msra.mxu0 0.0
    %89 = vmatprep.subr.mxu0 0.0
    %90 = vmatpush1.msra.mxu0 0.0
    %91 = vmatprep.subr.mxu0 0.0
    %92 = vmatpush1.msra.mxu0 0.0
    %93 = vmatprep.subr.mxu0 0.0
    %94 = vmatpush1.msra.mxu0 0.0
    %95 = vmatprep.subr.mxu0 0.0
    %96 = vmatpush1.msra.mxu0 0.0
    %97 = vmatprep.subr.mxu0 0.0
    %98 = vmatpush1.msra.mxu0 0.0
    %99 = vmatprep.subr.mxu0 0.0
    %100 = vmatpush1.msra.mxu0 0.0
    %101 = vmatprep.subr.mxu0 0.0
    %102 = vmatpush1.msra.mxu0 0.0
    %103 = vmatprep.subr.mxu0 0.0
    %104 = vmatpush1.msra.mxu0 0.0
    %105 = vmatprep.subr.mxu0 0.0
    %106 = vmatpush1.msra.mxu0 0.0
    %107 = vmatprep.subr.mxu0 0.0
    %108 = vmatpush1.msra.mxu0 0.0
    %109 = vmatprep.subr.mxu0 0.0
    %110 = vmatpush1.msra.mxu0 0.0
    %111 = vmatprep.subr.mxu0 0.0
    %112 = vmatpush1.msra.mxu0 0.0
    %113 = vmatprep.subr.mxu0 0.0
    %114 = vmatpush1.msra.mxu0 0.0
    %115 = vmatprep.subr.mxu0 0.0
    %116 = vmatpush1.msra.mxu0 0.0
    %117 = vmatprep.subr.mxu0 0.0
    %118 = vmatpush1.msra.mxu0 0.0
    %119 = vmatprep.subr.mxu0 0.0
    %120 = vmatpush1.msra.mxu0 0.0
    %121 = vmatprep.subr.mxu0 0.0
    %122 = vmatpush1.msra.mxu0 0.0
    %123 = vmatprep.subr.mxu0 0.0
    %124 = vmatpush1.msra.mxu0 0.0
    %125 = vmatprep.subr.mxu0 0.0
    %126 = vmatpush1.msra.mxu0 0.0
    %127 = vmatprep.subr.mxu0 0.0
    %128 = vmatpush1.msra.mxu0 0.0
    %129 = vmatprep.subr.mxu0 0.0
    %130 = vmatpush1.msra.mxu0 0.0
    %131 = vmatprep.subr.mxu0 0.0
    %132 = vmatpush1.msra.mxu0 0.0
    %133 = vmatprep.subr.mxu0 0.0
    %134 = vmatpush1.msra.mxu0 0.0
    %135 = vmatprep.subr.mxu0 0.0
    %136 = vmatpush1.msra.mxu0 0.0
    %137 = vmatprep.subr.mxu0 0.0
    %138 = vmatpush1.msra.mxu0 0.0
    %139 = vmatprep.subr.mxu0 0.0
    %140 = vmatpush1.msra.mxu0 0.0
    %141 = vmatprep.mubr.f32.mxu0 0.0
    %142 = vmatmul.mubr.f32.gmra.mrb[0].mxu0 %v72
    %v143 = vpop.f32.mrb[0].mxu0
    %v144 = vadd.f32 %v69, %v143
    %v145 = vpop.f32.mrb[0].mxu0
    %146 = vmatprep.mubr.f32.mxu0 0.0
    %147 = vmatmul.mubr.f32.gmra.mrb[0].mxu0 %v75
    %v148 = vpop.f32.mrb[0].mxu0
    %v149 = vadd.f32 %v69, %v148
    %v150 = vpop.f32.mrb[0].mxu0
    %151 = vdwg.mxu0
    %v152 = vtanh.pop %v144
    %v153 = vtanh.pop %v149
    %v154 = vld [vmem:[#allocation2] sm:$0xff]
    %v155 = vld [vmem:[#allocation2 + $0x8] sm:$0xff]
    %v156 = vld [vmem:[#allocation2 + $0x10] sm:$0xff]
    %v157 = vld [vmem:[#allocation2 + $0x18] sm:$0xff]
    %v158 = vld [vmem:[#allocation2 + $0x20] sm:$0xff]
    %v159 = vld [vmem:[#allocation2 + $0x28] sm:$0xff]
    %v160 = vld [vmem:[#allocation2 + $0x30] sm:$0xff]
    %v161 = vld [vmem:[#allocation2 + $0x38] sm:$0xff]
    %v162 = vld [vmem:[#allocation2 + $0x40] sm:$0xff]
    %v163 = vld [vmem:[#allocation2 + $0x48] sm:$0xff]
    %v164 = vld [vmem:[#allocation2 + $0x50] sm:$0xff]
    %v165 = vld [vmem:[#allocation2 + $0x58] sm:$0xff]
    %v166 = vld [vmem:[#allocation2 + $0x60] sm:$0xff]
    %v167 = vld [vmem:[#allocation2 + $0x68] sm:$0xff]
    %v168 = vld [vmem:[#allocation2 + $0x70] sm:$0xff]
    %v169 = vld [vmem:[#allocation2 + $0x78] sm:$0xff]
    %v170 = vlaneseq
    %v171 = vshrl.u32 %v170, 7
    %v172 = vsub.s32 1, %v171
    %v173 = vrot.slane %v61, %v172
    %174 = vmatprep.subr.mxu0 0.0
    %175 = vmatpush1.msra.mxu0 %v154
    %176 = vmatprep.subr.mxu0 0.0
    %177 = vmatpush1.msra.mxu0 %v155
    %178 = vmatprep.subr.mxu0 0.0
    %179 = vmatpush1.msra.mxu0 %v156
    %180 = vmatprep.subr.mxu0 0.0
    %181 = vmatpush1.msra.mxu0 %v157
    %182 = vmatprep.subr.mxu0 0.0
    %183 = vmatpush1.msra.mxu0 %v158
    %184 = vmatprep.subr.mxu0 0.0
    %185 = vmatpush1.msra.mxu0 %v159
    %186 = vmatprep.subr.mxu0 0.0
    %187 = vmatpush1.msra.mxu0 %v160
    %188 = vmatprep.subr.mxu0 0.0
    %189 = vmatpush1.msra.mxu0 %v161
    %190 = vmatprep.subr.mxu0 0.0
    %191 = vmatpush1.msra.mxu0 %v162
    %192 = vmatprep.subr.mxu0 0.0
    %193 = vmatpush1.msra.mxu0 %v163
    %194 = vmatprep.subr.mxu0 0.0
    %195 = vmatpush1.msra.mxu0 %v164
    %196 = vmatprep.subr.mxu0 0.0
    %197 = vmatpush1.msra.mxu0 %v165
    %198 = vmatprep.subr.mxu0 0.0
    %199 = vmatpush1.msra.mxu0 %v166
    %200 = vmatprep.subr.mxu0 0.0
    %201 = vmatpush1.msra.mxu0 %v167
    %202 = vmatprep.subr.mxu0 0.0
    %203 = vmatpush1.msra.mxu0 %v168
    %204 = vmatprep.subr.mxu0 0.0
    %205 = vmatpush1.msra.mxu0 %v169
    %206 = vmatprep.subr.mxu0 0.0
    %207 = vmatpush1.msra.mxu0 0.0
    %208 = vmatprep.subr.mxu0 0.0
    %209 = vmatpush1.msra.mxu0 0.0
    %210 = vmatprep.subr.mxu0 0.0
    %211 = vmatpush1.msra.mxu0 0.0
    %212 = vmatprep.subr.mxu0 0.0
    %213 = vmatpush1.msra.mxu0 0.0
    %214 = vmatprep.subr.mxu0 0.0
    %215 = vmatpush1.msra.mxu0 0.0
    %216 = vmatprep.subr.mxu0 0.0
    %217 = vmatpush1.msra.mxu0 0.0
    %218 = vmatprep.subr.mxu0 0.0
    %219 = vmatpush1.msra.mxu0 0.0
    %220 = vmatprep.subr.mxu0 0.0
    %221 = vmatpush1.msra.mxu0 0.0
    %222 = vmatprep.subr.mxu0 0.0
    %223 = vmatpush1.msra.mxu0 0.0
    %224 = vmatprep.subr.mxu0 0.0
    %225 = vmatpush1.msra.mxu0 0.0
    %226 = vmatprep.subr.mxu0 0.0
    %227 = vmatpush1.msra.mxu0 0.0
    %228 = vmatprep.subr.mxu0 0.0
    %229 = vmatpush1.msra.mxu0 0.0
    %230 = vmatprep.subr.mxu0 0.0
    %231 = vmatpush1.msra.mxu0 0.0
    %232 = vmatprep.subr.mxu0 0.0
    %233 = vmatpush1.msra.mxu0 0.0
    %234 = vmatprep.subr.mxu0 0.0
    %235 = vmatpush1.msra.mxu0 0.0
    %236 = vmatprep.subr.mxu0 0.0
    %237 = vmatpush1.msra.mxu0 0.0
    %238 = vmatprep.mubr.f32.mxu0 0.0
    %239 = vmatmul.mubr.f32.gmra.mrb[0].mxu0 %v152
    %v240 = vpop.f32.mrb[0].mxu0
    %v241 = vadd.f32 %v173, %v240
    %v242 = vpop.f32.mrb[0].mxu0
    %243 = vmatprep.mubr.f32.mxu0 0.0
    %244 = vmatmul.mubr.f32.gmra.mrb[0].mxu0 %v153
    %v245 = vpop.f32.mrb[0].mxu0
    %v246 = vadd.f32 %v173, %v245
    %v247 = vpop.f32.mrb[0].mxu0
    %248 = vdwg.mxu0
    %v249 = vtanh.pop %v241
    %v250 = vtanh.pop %v246
    %253 = vrot.lane.b32.xlu0 %v249, 64
    %v254 = vpop.permute.xlu0 %253
    %255 = vrot.lane.b32.xlu0 %v250, 64
    %v256 = vpop.permute.xlu0 %255
    %vm259 = vcmask 523264
    %260 = vst.msk [vmem:[%s5] sm:$0xff] %vm259, %v254
    %261 = vst.msk [vmem:[%s5 + $0x8] sm:$0xff] %vm259, %v256
    %v262 = vlaneseq
    %v263 = vshrl.u32 %v262, 7
    %v264 = vsub.s32 2, %v263
    %v265 = vrot.slane %v61, %v264
    %v266 = vmul.f32 %v249, %v265
    %v267 = vmul.f32 %v250, %v265
    %268 = vadd.xlane.f32.xlu0 %v266
    %v269 = vpop.xlane.xlu0 %268
    %270 = vadd.xlane.f32.xlu0 %v267
    %v271 = vpop.xlane.xlu0 %270
    %v272 = vld [vmem:[#allocation6] sm:$0x1]
    %v274 = vlaneseq
    %v275 = vshrl.u32 %v274, 7
    %v276 = vsub.s32 0, %v275
    %v277 = vrot.slane %v272, %v276
    %v279 = vadd.f32 %v269, %v277
    %v280 = vadd.f32 %v271, %v277
    %281 = vst [vmem:[%s6] sm:$0xff] %v279
    %282 = vst [vmem:[%s6 + $0x8] sm:$0xff] %v280
    // Predicated region
    $region34: #{mlp_base_forward.1} parent=1 // pred_check
      _
    $region35: #{mlp_base_forward.1} parent=1 // pred_check_branch
      %284 = sbr.rel (0) target = $region37
    $region36: #{mlp_base_forward.1} parent=1 // pred_region
      _
    $region37: #{mlp_base_forward.1} parent=1 // pred_fallthru
      _
    // Predicated region
    $region38: #{mlp_base_forward.1} parent=1 // pred_check
      _
    $region39: #{mlp_base_forward.1} parent=1 // pred_check_branch
      %286 = sbr.rel (0) target = $region41
    $region40: #{mlp_base_forward.1} parent=1 // pred_region
      _
    $region41: #{mlp_base_forward.1} parent=1 // pred_fallthru
      _
    // Predicated region
    $region42: #{mlp_base_forward.1} parent=1 // pred_check
      _
    $region43: #{mlp_base_forward.1} parent=1 // pred_check_branch
      %288 = sbr.rel (0) target = $region45
    $region44: #{mlp_base_forward.1} parent=1 // pred_region
      _
    $region45: #{mlp_base_forward.1} parent=1 // pred_fallthru
      _
    // Predicated region
    $region46: #{mlp_base_forward.1} parent=1 // pred_check
      _
    $region47: #{mlp_base_forward.1} parent=1 // pred_check_branch
      %290 = sbr.rel (0) target = $region49
    $region48: #{mlp_base_forward.1} parent=1 // pred_region
      _
    $region49: #{mlp_base_forward.1} parent=1 // pred_fallthru
      _
    %291 = vsyncpa [#allocation3], 1
    %292 = vsyncpa [#allocation5], 1

</llo_original>
